<compile_context>
chip_gen: v6e
topology: v6e:2x2x1
jax: 0.10.0
libtpu: 0.0.40
codegen_flags: <defaults>
</compile_context>

<pallas_src>
import functools

import jax
import jax.numpy as jnp
from jax.experimental import pallas as pl
from jax.experimental.pallas import tpu as pltpu

BN_EPS = 1e-5
LANE = 128


def _round_up(x, m):
    return ((x + m - 1) // m) * m


# ---------------------------------------------------------------------------
# Pallas kernel: fused DoubleConv_1d = (conv k3 p1 -> BN(train) -> ReLU) x 2
# ---------------------------------------------------------------------------
def double_conv_kernel(xim_ref, mask_ref, w1_ref, g1_ref, b1_ref,
                       w2_ref, g2_ref, b2_ref, out_ref, apad_ref,
                       *, valid_count):
    # xim_ref : (R-2, 3*Cin)  bf16  im2col of the zero-padded, row-flattened input
    # mask_ref: (R-2, 1)      f32   1.0 on real (n, l) rows, 0.0 on pad rows
    # w1_ref  : (3*Cin, CM)   bf16  conv1 weight slab (tap-major rows)
    # g1/b1   : (1, CM)       f32   BN1 gamma / beta (lane padded)
    # w2_ref  : (3*CM, CO)    bf16  conv2 weight slab (tap-major rows)
    # g2/b2   : (1, CO)       f32   BN2 gamma / beta (lane padded)
    # out_ref : (R-2, CO)     f32   lane-dense output over the core rows
    # apad_ref: (R, CM)       bf16  scratch: zero-padded BN1 activations
    R2 = xim_ref.shape[0]                      # = R - 2 "core" rows
    CM = w1_ref.shape[1]
    inv_cnt = 1.0 / float(valid_count)
    mask = mask_ref[...]                       # (R2, 1) f32

    # ---- conv1: one fused im2col matmul over all (batch, length) rows ----
    h = jnp.dot(xim_ref[...], w1_ref[...],
                preferred_element_type=jnp.float32)          # (R2, CM) f32

    # ---- BN1 (training-mode batch stats over real rows only) + ReLU ----
    mean1 = jnp.sum(h * mask, axis=0, keepdims=True) * inv_cnt
    d1 = (h - mean1) * mask
    var1 = jnp.sum(d1 * d1, axis=0, keepdims=True) * inv_cnt
    inv1 = jax.lax.rsqrt(var1 + BN_EPS)
    a = jnp.maximum((h - mean1) * inv1 * g1_ref[...] + b1_ref[...], 0.0) * mask

    # ---- zero-padded activation scratch for conv2 (pl.ds store, no concat) ----
    apad_ref[...] = jnp.zeros(apad_ref.shape, apad_ref.dtype)
    apad_ref[pl.ds(1, R2), :] = a.astype(apad_ref.dtype)

    # ---- conv2: 3 shifted-row matmuls (K = CM, a full 128 lane tile each) ----
    ap = apad_ref[...]                                       # (R, CM) bf16
    w2 = w2_ref[...]                                         # (3*CM, CO) bf16
    y = jnp.dot(ap[0:R2], w2[0:CM], preferred_element_type=jnp.float32)
    y = y + jnp.dot(ap[1:1 + R2], w2[CM:2 * CM],
                    preferred_element_type=jnp.float32)
    y = y + jnp.dot(ap[2:2 + R2], w2[2 * CM:3 * CM],
                    preferred_element_type=jnp.float32)      # (R2, CO) f32

    # ---- BN2 + ReLU ----
    mean2 = jnp.sum(y * mask, axis=0, keepdims=True) * inv_cnt
    d2 = (y - mean2) * mask
    var2 = jnp.sum(d2 * d2, axis=0, keepdims=True) * inv_cnt
    inv2 = jax.lax.rsqrt(var2 + BN_EPS)
    o = jnp.maximum((y - mean2) * inv2 * g2_ref[...] + b2_ref[...], 0.0) * mask

    # ---- single aligned, lane-dense writeback (CO is a multiple of 128) ----
    out_ref[...] = o.astype(out_ref.dtype)


def double_conv_pallas(xim, maskc, w1s, g1, b1, w2s, g2, b2, *, valid_count):
    R2 = xim.shape[0]
    CM = w1s.shape[1]
    CO = w2s.shape[1]
    kernel = functools.partial(double_conv_kernel, valid_count=valid_count)
    vmem = pl.BlockSpec(memory_space=pltpu.MemorySpace.VMEM)
    return pl.pallas_call(
        kernel,
        out_shape=jax.ShapeDtypeStruct((R2, CO), jnp.float32),
        in_specs=[vmem] * 8,
        out_specs=vmem,
        scratch_shapes=[pltpu.VMEM((R2 + 2, CM), jnp.bfloat16)],
        compiler_params=pltpu.CompilerParams(
            vmem_limit_bytes=32 * 1024 * 1024),
    )(xim, maskc, w1s, g1, b1, w2s, g2, b2)


# ---------------------------------------------------------------------------
# Gather-free x2 linear upsample (align_corners=True) as a static matmul
# ---------------------------------------------------------------------------
def upsample_matrix_x2(L, dtype=jnp.float32):
    """(L, 2L) matrix M with x @ M == nn.Upsample(scale_factor=2, mode='linear',
    align_corners=True)(x) applied along the last axis."""
    Lout = 2 * L
    if L == 1:
        return jnp.ones((1, Lout), dtype)
    pos = jnp.arange(Lout, dtype=jnp.float32) * (L - 1) / (Lout - 1)
    lo = jnp.clip(jnp.floor(pos), 0.0, L - 2)
    frac = pos - lo
    src = jnp.arange(L, dtype=jnp.float32)[:, None]          # (L, 1)
    W = (jnp.where(src == lo[None, :], 1.0 - frac[None, :], 0.0)
         + jnp.where(src == lo[None, :] + 1.0, frac[None, :], 0.0))
    return W.astype(dtype)


# ---------------------------------------------------------------------------
# Jitted functional forward (all glue + the fused kernel in one program)
# ---------------------------------------------------------------------------
@functools.partial(jax.jit, static_argnames=("out_channels", "co"))
def up1d_forward(x1, x2, w1s, g1, b1, w2s, g2, b2, *, out_channels, co):
    # x1: (N, C1, L1), x2: (N, C2, L2), C1 + C2 == in_channels (NCL layout).
    _, _, L1 = x1.shape
    # Upsample x2 as a static interpolation matmul (no dynamic gather).
    x1u = jnp.einsum('ncl,lm->ncm', x1,
                     upsample_matrix_x2(L1).astype(x1.dtype))
    diff = x2.shape[-1] - x1u.shape[-1]
    left = diff // 2
    right = diff - left
    # lax.pad supports negative padding (crop), matching F.pad semantics.
    x1u = jax.lax.pad(x1u, jnp.zeros((), x1u.dtype),
                      ((0, 0, 0), (0, 0, 0), (left, right, 0)))
    x = jnp.concatenate([x2, x1u], axis=1)                    # (N, Cin, L)
    N, Cin, L = x.shape

    # Glue: NCL -> NLC -> row-flattened with in-band per-batch pad rows, and
    # the conv1 im2col (K = 3*Cin) built once here.
    x_nlc = jnp.transpose(x, (0, 2, 1)).astype(jnp.float32)   # (N, L, Cin)
    x_pad = jnp.pad(x_nlc, ((0, 0), (1, 1), (0, 0)))          # (N, L+2, Cin)
    R = N * (L + 2)
    xf = x_pad.reshape(R, Cin)
    xim = jnp.concatenate([xf[0:R - 2], xf[1:R - 1], xf[2:R]],
                          axis=1).astype(jnp.bfloat16)        # (R-2, 3*Cin)
    # 0/1 mask over core rows: 1 on real (n, l) rows, 0 on pad rows.
    p = jnp.arange(1, R - 1)
    r = p % (L + 2)
    maskc = ((r >= 1) & (r <= L)).astype(jnp.float32)[:, None]

    y_core = double_conv_pallas(xim, maskc, w1s, g1, b1, w2s, g2, b2,
                                valid_count=N * L)            # (R-2, CO)
    y_full = jnp.pad(y_core, ((1, 1), (0, 0)))                # back to (R, CO)
    y = y_full.reshape(N, L + 2, co)[:, 1:L + 1, :out_channels]
    return jnp.transpose(y, (0, 2, 1))                        # (N, Cout, L)


# ---------------------------------------------------------------------------
# Module wrapper
# ---------------------------------------------------------------------------
class Up1dPallas:
    """Up_1d(in_channels, out_channels, bilinear=True), training-mode BatchNorm."""

    def __init__(self, in_channels, out_channels, key):
        mid_channels = in_channels // 2
        self.in_channels = in_channels
        self.mid_channels = mid_channels
        self.out_channels = out_channels
        k1, k2, k3, k4, k5, k6 = jax.random.split(key, 6)

        # Unpadded f32 parameters ("true" module parameters, used by the ref).
        # Conv weights stored as (tap, in_ch, out_ch) == torch weight (out,in,3)
        # transposed to (3, in, out).
        self.w1_f32 = (0.1 * jax.random.normal(
            k1, (3, in_channels, mid_channels))).astype(jnp.float32)
        self.w2_f32 = (0.1 * jax.random.normal(
            k2, (3, mid_channels, out_channels))).astype(jnp.float32)
        self.g1_f32 = (1.0 + 0.1 * jax.random.normal(k3, (1, mid_channels))).astype(jnp.float32)
        self.b1_f32 = (0.1 * jax.random.normal(k4, (1, mid_channels))).astype(jnp.float32)
        self.g2_f32 = (1.0 + 0.1 * jax.random.normal(k5, (1, out_channels))).astype(jnp.float32)
        self.b2_f32 = (0.1 * jax.random.normal(k6, (1, out_channels))).astype(jnp.float32)

        # Lane-padded kernel-side parameters, built once here (not per step).
        # bf16 matmul weights, f32 BN affine. Padded gamma=1 / beta=0 keep the
        # padded channels identically zero through both BN+ReLU stages.
        CM = _round_up(mid_channels, LANE)
        CO = _round_up(out_channels, LANE)
        self.cm, self.co = CM, CO

        w1s = jnp.zeros((3 * in_channels, CM), jnp.float32)
        w1s = w1s.at[:, :mid_channels].set(
            self.w1_f32.reshape(3 * in_channels, mid_channels))
        self.w1s = w1s.astype(jnp.bfloat16)

        w2s = jnp.zeros((3 * CM, CO), jnp.float32)
        for k in range(3):
            w2s = w2s.at[k * CM:k * CM + mid_channels, :out_channels].set(self.w2_f32[k])
        self.w2s = w2s.astype(jnp.bfloat16)

        self.g1 = jnp.ones((1, CM), jnp.float32).at[:, :mid_channels].set(self.g1_f32)
        self.b1 = jnp.zeros((1, CM), jnp.float32).at[:, :mid_channels].set(self.b1_f32)
        self.g2 = jnp.ones((1, CO), jnp.float32).at[:, :out_channels].set(self.g2_f32)
        self.b2 = jnp.zeros((1, CO), jnp.float32).at[:, :out_channels].set(self.b2_f32)

    def __call__(self, x1, x2):
        return up1d_forward(x1, x2, self.w1s, self.g1, self.b1,
                            self.w2s, self.g2, self.b2,
                            out_channels=self.out_channels, co=self.co)


# ---------------- pure-JAX reference (matching bf16-matmul / f32-BN numerics) ---
def _double_conv_ref(x_nlc, w1, g1, b1, w2, g2, b2):
    def conv(x, w):
        N, L, _ = x.shape
        xp = jnp.pad(x, ((0, 0), (1, 1), (0, 0))).astype(jnp.bfloat16)
        wb = w.astype(jnp.bfloat16)
        return sum(jnp.einsum('nlc,cd->nld', xp[:, k:k + L, :], wb[k],
                              preferred_element_type=jnp.float32)
                   for k in range(3))

    def bn_relu(h, g, b):
        mean = h.mean(axis=(0, 1), keepdims=True)
        var = ((h - mean) ** 2).mean(axis=(0, 1), keepdims=True)
        return jnp.maximum((h - mean) * jax.lax.rsqrt(var + BN_EPS) * g + b, 0.0)

    h = bn_relu(conv(x_nlc, w1), g1, b1)
    return bn_relu(conv(h.astype(jnp.float32), w2), g2, b2)


if __name__ == "__main__":
    key = jax.random.PRNGKey(0)
    k_x1, k_x2, k_p = jax.random.split(key, 3)

    in_channels, out_channels = 8, 4
    N, L1 = 2, 8
    C_half = in_channels // 2            # both skip and upsampled branch: in//2 ch
    x1 = jax.random.normal(k_x1, (N, C_half, L1), dtype=jnp.float32)       # (2, 4, 8)
    x2 = jax.random.normal(k_x2, (N, C_half, 2 * L1), dtype=jnp.float32)   # (2, 4, 16)

    mod = Up1dPallas(in_channels, out_channels, k_p)
    out = jax.block_until_ready(mod(x1, x2))
    assert out.shape == (N, out_channels, 2 * L1), out.shape

    # sanity-check the Pallas hot path against a pure-JAX reference
    x1_up = jnp.einsum('ncl,lm->ncm', x1, upsample_matrix_x2(L1))
    x = jnp.concatenate([x2, x1_up], axis=1)
    ref = _double_conv_ref(jnp.transpose(x, (0, 2, 1)),
                           mod.w1_f32, mod.g1_f32, mod.b1_f32,
                           mod.w2_f32, mod.g2_f32, mod.b2_f32)
    ref = jnp.transpose(ref, (0, 2, 1))
    max_err = float(jnp.max(jnp.abs(out - ref)))
    assert jnp.allclose(out, ref, atol=1e-2, rtol=1e-2), max_err

    print("KERNEL_OK")
</pallas_src>

<mosaic_0001>
module attributes {stable_mosaic.version = 11 : i64} {
  func.func @double_conv_kernel(%arg0: memref<34x24xbf16, #tpu.memory_space<vmem>>, %arg1: memref<34x1xf32, #tpu.memory_space<vmem>>, %arg2: memref<24x128xbf16, #tpu.memory_space<vmem>>, %arg3: memref<1x128xf32, #tpu.memory_space<vmem>>, %arg4: memref<1x128xf32, #tpu.memory_space<vmem>>, %arg5: memref<384x128xbf16, #tpu.memory_space<vmem>>, %arg6: memref<1x128xf32, #tpu.memory_space<vmem>>, %arg7: memref<1x128xf32, #tpu.memory_space<vmem>>, %arg8: memref<34x128xf32, #tpu.memory_space<vmem>>, %arg9: memref<36x128xbf16, #tpu.memory_space<vmem>>) attributes {dimension_semantics = [], scalar_prefetch = 0 : i64, scratch_operands = 1 : i64, tpu.core_type = #tpu.core_type<tc>} {
    %c0 = arith.constant 0 : index
    %c0_0 = arith.constant 0 : index
    %0 = vector.load %arg1[%c0, %c0_0] : memref<34x1xf32, #tpu.memory_space<vmem>>, vector<34x1xf32>
    %c0_1 = arith.constant 0 : index
    %c0_2 = arith.constant 0 : index
    %1 = vector.load %arg0[%c0_1, %c0_2] : memref<34x24xbf16, #tpu.memory_space<vmem>>, vector<34x24xbf16>
    %c0_3 = arith.constant 0 : index
    %c0_4 = arith.constant 0 : index
    %2 = vector.load %arg2[%c0_3, %c0_4] : memref<24x128xbf16, #tpu.memory_space<vmem>>, vector<24x128xbf16>
    %cst = arith.constant dense<0.000000e+00> : vector<34x128xf32>
    %3 = tpu.matmul %1, %2, %cst {dimension_numbers = #tpu.dot_dimension_numbers<[1], [0], [0], [1], [0, 0, 1, 1], [], []>} : vector<34x24xbf16>, vector<24x128xbf16>, vector<34x128xf32> -> vector<34x128xf32>
    %4 = vector.broadcast %0 : vector<34x1xf32> to vector<34x128xf32>
    %5 = arith.mulf %3, %4 : vector<34x128xf32>
    %cst_5 = arith.constant dense<0.000000e+00> : vector<128xf32>
    %6 = vector.multi_reduction <add>, %5, %cst_5 [0] : vector<34x128xf32> to vector<128xf32>
    %7 = vector.shape_cast %6 : vector<128xf32> to vector<1x128xf32>
    %cst_6 = arith.constant 3.125000e-02 : f32
    %8 = vector.broadcast %cst_6 : f32 to vector<1x128xf32>
    %9 = arith.mulf %7, %8 : vector<1x128xf32>
    %10 = vector.broadcast %9 : vector<1x128xf32> to vector<34x128xf32>
    %11 = arith.subf %3, %10 : vector<34x128xf32>
    %12 = vector.broadcast %0 : vector<34x1xf32> to vector<34x128xf32>
    %13 = arith.mulf %11, %12 : vector<34x128xf32>
    %14 = arith.mulf %13, %13 : vector<34x128xf32>
    %cst_7 = arith.constant dense<0.000000e+00> : vector<128xf32>
    %15 = vector.multi_reduction <add>, %14, %cst_7 [0] : vector<34x128xf32> to vector<128xf32>
    %16 = vector.shape_cast %15 : vector<128xf32> to vector<1x128xf32>
    %cst_8 = arith.constant 3.125000e-02 : f32
    %17 = vector.broadcast %cst_8 : f32 to vector<1x128xf32>
    %18 = arith.mulf %16, %17 : vector<1x128xf32>
    %cst_9 = arith.constant 9.99999974E-6 : f32
    %19 = vector.broadcast %cst_9 : f32 to vector<1x128xf32>
    %20 = arith.addf %18, %19 : vector<1x128xf32>
    %21 = math.rsqrt %20 : vector<1x128xf32>
    %22 = vector.broadcast %9 : vector<1x128xf32> to vector<34x128xf32>
    %23 = arith.subf %3, %22 : vector<34x128xf32>
    %24 = vector.broadcast %21 : vector<1x128xf32> to vector<34x128xf32>
    %25 = arith.mulf %23, %24 : vector<34x128xf32>
    %c0_10 = arith.constant 0 : index
    %c0_11 = arith.constant 0 : index
    %26 = vector.load %arg3[%c0_10, %c0_11] : memref<1x128xf32, #tpu.memory_space<vmem>>, vector<1x128xf32>
    %27 = vector.broadcast %26 : vector<1x128xf32> to vector<34x128xf32>
    %28 = arith.mulf %25, %27 : vector<34x128xf32>
    %c0_12 = arith.constant 0 : index
    %c0_13 = arith.constant 0 : index
    %29 = vector.load %arg4[%c0_12, %c0_13] : memref<1x128xf32, #tpu.memory_space<vmem>>, vector<1x128xf32>
    %30 = vector.broadcast %29 : vector<1x128xf32> to vector<34x128xf32>
    %31 = arith.addf %28, %30 : vector<34x128xf32>
    %cst_14 = arith.constant 0.000000e+00 : f32
    %32 = vector.broadcast %cst_14 : f32 to vector<34x128xf32>
    %33 = arith.maximumf %31, %32 : vector<34x128xf32>
    %34 = vector.broadcast %0 : vector<34x1xf32> to vector<34x128xf32>
    %35 = arith.mulf %33, %34 : vector<34x128xf32>
    %cst_15 = arith.constant 0.000000e+00 : bf16
    %36 = vector.broadcast %cst_15 : bf16 to vector<36x128xbf16>
    %c0_16 = arith.constant 0 : index
    %c0_17 = arith.constant 0 : index
    %37 = vector.load %arg9[%c0_16, %c0_17] : memref<36x128xbf16, #tpu.memory_space<vmem>>, vector<36x128xbf16>
    tpu.vector_store %arg9[%c0_16, %c0_17], %36 {strides = array<i32>} : memref<36x128xbf16, #tpu.memory_space<vmem>>, vector<36x128xbf16>,
    %38 = arith.truncf %35 : vector<34x128xf32> to vector<34x128xbf16>
    %c1 = arith.constant 1 : index
    %c0_18 = arith.constant 0 : index
    %39 = vector.load %arg9[%c1, %c0_18] : memref<36x128xbf16, #tpu.memory_space<vmem>>, vector<34x128xbf16>
    tpu.vector_store %arg9[%c1, %c0_18], %38 {strides = array<i32>} : memref<36x128xbf16, #tpu.memory_space<vmem>>, vector<34x128xbf16>,
    %c0_19 = arith.constant 0 : index
    %c0_20 = arith.constant 0 : index
    %40 = vector.load %arg9[%c0_19, %c0_20] : memref<36x128xbf16, #tpu.memory_space<vmem>>, vector<36x128xbf16>
    %c0_21 = arith.constant 0 : index
    %c0_22 = arith.constant 0 : index
    %41 = vector.load %arg5[%c0_21, %c0_22] : memref<384x128xbf16, #tpu.memory_space<vmem>>, vector<384x128xbf16>
    %42 = vector.extract_strided_slice %40 {offsets = [0, 0], sizes = [34, 128], strides = [1, 1]} : vector<36x128xbf16> to vector<34x128xbf16>
    %43 = vector.extract_strided_slice %41 {offsets = [0, 0], sizes = [128, 128], strides = [1, 1]} : vector<384x128xbf16> to vector<128x128xbf16>
    %cst_23 = arith.constant dense<0.000000e+00> : vector<34x128xf32>
    %44 = tpu.matmul %42, %43, %cst_23 {dimension_numbers = #tpu.dot_dimension_numbers<[1], [0], [0], [1], [0, 0, 1, 1], [], []>} : vector<34x128xbf16>, vector<128x128xbf16>, vector<34x128xf32> -> vector<34x128xf32>
    %45 = vector.extract_strided_slice %40 {offsets = [1, 0], sizes = [34, 128], strides = [1, 1]} : vector<36x128xbf16> to vector<34x128xbf16>
    %46 = vector.extract_strided_slice %41 {offsets = [128, 0], sizes = [128, 128], strides = [1, 1]} : vector<384x128xbf16> to vector<128x128xbf16>
    %cst_24 = arith.constant dense<0.000000e+00> : vector<34x128xf32>
    %47 = tpu.matmul %45, %46, %cst_24 {dimension_numbers = #tpu.dot_dimension_numbers<[1], [0], [0], [1], [0, 0, 1, 1], [], []>} : vector<34x128xbf16>, vector<128x128xbf16>, vector<34x128xf32> -> vector<34x128xf32>
    %48 = arith.addf %44, %47 : vector<34x128xf32>
    %49 = vector.extract_strided_slice %40 {offsets = [2, 0], sizes = [34, 128], strides = [1, 1]} : vector<36x128xbf16> to vector<34x128xbf16>
    %50 = vector.extract_strided_slice %41 {offsets = [256, 0], sizes = [128, 128], strides = [1, 1]} : vector<384x128xbf16> to vector<128x128xbf16>
    %cst_25 = arith.constant dense<0.000000e+00> : vector<34x128xf32>
    %51 = tpu.matmul %49, %50, %cst_25 {dimension_numbers = #tpu.dot_dimension_numbers<[1], [0], [0], [1], [0, 0, 1, 1], [], []>} : vector<34x128xbf16>, vector<128x128xbf16>, vector<34x128xf32> -> vector<34x128xf32>
    %52 = arith.addf %48, %51 : vector<34x128xf32>
    %53 = vector.broadcast %0 : vector<34x1xf32> to vector<34x128xf32>
    %54 = arith.mulf %52, %53 : vector<34x128xf32>
    %cst_26 = arith.constant dense<0.000000e+00> : vector<128xf32>
    %55 = vector.multi_reduction <add>, %54, %cst_26 [0] : vector<34x128xf32> to vector<128xf32>
    %56 = vector.shape_cast %55 : vector<128xf32> to vector<1x128xf32>
    %cst_27 = arith.constant 3.125000e-02 : f32
    %57 = vector.broadcast %cst_27 : f32 to vector<1x128xf32>
    %58 = arith.mulf %56, %57 : vector<1x128xf32>
    %59 = vector.broadcast %58 : vector<1x128xf32> to vector<34x128xf32>
    %60 = arith.subf %52, %59 : vector<34x128xf32>
    %61 = vector.broadcast %0 : vector<34x1xf32> to vector<34x128xf32>
    %62 = arith.mulf %60, %61 : vector<34x128xf32>
    %63 = arith.mulf %62, %62 : vector<34x128xf32>
    %cst_28 = arith.constant dense<0.000000e+00> : vector<128xf32>
    %64 = vector.multi_reduction <add>, %63, %cst_28 [0] : vector<34x128xf32> to vector<128xf32>
    %65 = vector.shape_cast %64 : vector<128xf32> to vector<1x128xf32>
    %cst_29 = arith.constant 3.125000e-02 : f32
    %66 = vector.broadcast %cst_29 : f32 to vector<1x128xf32>
    %67 = arith.mulf %65, %66 : vector<1x128xf32>
    %cst_30 = arith.constant 9.99999974E-6 : f32
    %68 = vector.broadcast %cst_30 : f32 to vector<1x128xf32>
    %69 = arith.addf %67, %68 : vector<1x128xf32>
    %70 = math.rsqrt %69 : vector<1x128xf32>
    %71 = vector.broadcast %58 : vector<1x128xf32> to vector<34x128xf32>
    %72 = arith.subf %52, %71 : vector<34x128xf32>
    %73 = vector.broadcast %70 : vector<1x128xf32> to vector<34x128xf32>
    %74 = arith.mulf %72, %73 : vector<34x128xf32>
    %c0_31 = arith.constant 0 : index
    %c0_32 = arith.constant 0 : index
    %75 = vector.load %arg6[%c0_31, %c0_32] : memref<1x128xf32, #tpu.memory_space<vmem>>, vector<1x128xf32>
    %76 = vector.broadcast %75 : vector<1x128xf32> to vector<34x128xf32>
    %77 = arith.mulf %74, %76 : vector<34x128xf32>
    %c0_33 = arith.constant 0 : index
    %c0_34 = arith.constant 0 : index
    %78 = vector.load %arg7[%c0_33, %c0_34] : memref<1x128xf32, #tpu.memory_space<vmem>>, vector<1x128xf32>
    %79 = vector.broadcast %78 : vector<1x128xf32> to vector<34x128xf32>
    %80 = arith.addf %77, %79 : vector<34x128xf32>
    %cst_35 = arith.constant 0.000000e+00 : f32
    %81 = vector.broadcast %cst_35 : f32 to vector<34x128xf32>
    %82 = arith.maximumf %80, %81 : vector<34x128xf32>
    %83 = vector.broadcast %0 : vector<34x1xf32> to vector<34x128xf32>
    %84 = arith.mulf %82, %83 : vector<34x128xf32>
    %c0_36 = arith.constant 0 : index
    %c0_37 = arith.constant 0 : index
    %85 = vector.load %arg8[%c0_36, %c0_37] : memref<34x128xf32, #tpu.memory_space<vmem>>, vector<34x128xf32>
    tpu.vector_store %arg8[%c0_36, %c0_37], %84 {strides = array<i32>} : memref<34x128xf32, #tpu.memory_space<vmem>>, vector<34x128xf32>,
    return
  }
}

</mosaic_0001>

<llo_original>
// kernel: up1d_forward.1
$region0: #{up1d_forward.1}
  #allocation0 [shape = 'u32[]', space=smem, size = 0x4, offset = 0x4, fixed_abs, tag = 'smem constant byte address 0x4 - core index']
  #allocation1 [shape = 'u32[144,128]{1,0:T(1,128)}', space=vmem, size = 0x12000, scoped, tag = 'internal scratch']
  #allocation2 [shape = 'bf16[36,128]{1,0:T(8,128)(2,1)}', space=vmem, size = 0x2800, scoped, tag = 'scratch operand']
  %s0 = inlined_call_operand.vmem [shape: bf16[34,24], index: 0, kind: input, shape index: {}]
  %s1 = inlined_call_operand.vmem [shape: f32[34,1], index: 1, kind: input, shape index: {}]
  %s2 = inlined_call_operand.vmem [shape: bf16[24,128], index: 2, kind: input, shape index: {}]
  %s3 = inlined_call_operand.vmem [shape: f32[1,128], index: 3, kind: input, shape index: {}]
  %s4 = inlined_call_operand.vmem [shape: f32[1,128], index: 4, kind: input, shape index: {}]
  %s5 = inlined_call_operand.vmem [shape: bf16[384,128], index: 5, kind: input, shape index: {}]
  %s6 = inlined_call_operand.vmem [shape: f32[1,128], index: 6, kind: input, shape index: {}]
  %s7 = inlined_call_operand.vmem [shape: f32[1,128], index: 7, kind: input, shape index: {}]
  %s8 = inlined_call_operand.vmem [shape: f32[34,128], index: 8, kind: output, shape index: {}]
  %s9 = sld [smem:[#allocation0]]
  $region42: #{up1d_forward.1} parent=0
    _
  %s11 = ssub.s32 1, %s9
  %s12 = scalar_select 0, %s11, %s9
  // Predicated region
  $region2: #{up1d_forward.1} parent=0 // pred_check
    _
  $region3: #{up1d_forward.1} parent=0 // pred_check_branch
    %14 = sbr.rel (0) target = $region5
  $region4: #{up1d_forward.1} parent=0 // pred_region
    _
  $region5: #{up1d_forward.1} parent=0 // pred_fallthru
    _
  // Predicated region
  $region6: #{up1d_forward.1} parent=0 // pred_check
    _
  $region7: #{up1d_forward.1} parent=0 // pred_check_branch
    %16 = sbr.rel (0) target = $region9
  $region8: #{up1d_forward.1} parent=0 // pred_region
    _
  $region9: #{up1d_forward.1} parent=0 // pred_fallthru
    _
  // Predicated region
  $region10: #{up1d_forward.1} parent=0 // pred_check
    _
  $region11: #{up1d_forward.1} parent=0 // pred_check_branch
    %18 = sbr.rel (0) target = $region13
  $region12: #{up1d_forward.1} parent=0 // pred_region
    _
  $region13: #{up1d_forward.1} parent=0 // pred_fallthru
    _
  // Predicated region
  $region14: #{up1d_forward.1} parent=0 // pred_check
    _
  $region15: #{up1d_forward.1} parent=0 // pred_check_branch
    %20 = sbr.rel (0) target = $region17
  $region16: #{up1d_forward.1} parent=0 // pred_region
    _
  $region17: #{up1d_forward.1} parent=0 // pred_fallthru
    _
  // Predicated region
  $region18: #{up1d_forward.1} parent=0 // pred_check
    _
  $region19: #{up1d_forward.1} parent=0 // pred_check_branch
    %22 = sbr.rel (0) target = $region21
  $region20: #{up1d_forward.1} parent=0 // pred_region
    _
  $region21: #{up1d_forward.1} parent=0 // pred_fallthru
    _
  // Predicated region
  $region22: #{up1d_forward.1} parent=0 // pred_check
    _
  $region23: #{up1d_forward.1} parent=0 // pred_check_branch
    %24 = sbr.rel (0) target = $region25
  $region24: #{up1d_forward.1} parent=0 // pred_region
    _
  $region25: #{up1d_forward.1} parent=0 // pred_fallthru
    _
  // Predicated region
  $region26: #{up1d_forward.1} parent=0 // pred_check
    _
  $region27: #{up1d_forward.1} parent=0 // pred_check_branch
    %26 = sbr.rel (0) target = $region29
  $region28: #{up1d_forward.1} parent=0 // pred_region
    _
  $region29: #{up1d_forward.1} parent=0 // pred_fallthru
    _
  // Predicated region
  $region30: #{up1d_forward.1} parent=0 // pred_check
    _
  $region31: #{up1d_forward.1} parent=0 // pred_check_branch
    %28 = sbr.rel (0) target = $region33
  $region32: #{up1d_forward.1} parent=0 // pred_region
    _
  $region33: #{up1d_forward.1} parent=0 // pred_fallthru
    _
  %v30 = vld [vmem:[%s1] sm:$0xff]
  %v31 = vld [vmem:[%s1 + $0x8] sm:$0xff]
  %v32 = vld [vmem:[%s1 + $0x10] sm:$0xff]
  %v33 = vld [vmem:[%s1 + $0x18] sm:$0xff]
  %v34 = vld [vmem:[%s1 + $0x20] sm:$0x3]
  %v35 = vld [vmem:[%s0] sm:$0xf]
  %v36 = vld [vmem:[%s0 + $0x4] sm:$0xf]
  %v37 = vld [vmem:[%s0 + $0x8] sm:$0xf]
  %v38 = vld [vmem:[%s0 + $0xc] sm:$0xf]
  %v39 = vld [vmem:[%s0 + $0x10] sm:$0x1]
  %v40 = vld [vmem:[%s2] sm:$0xf]
  %v41 = vld [vmem:[%s2 + $0x4] sm:$0xf]
  %v42 = vld [vmem:[%s2 + $0x8] sm:$0xf]
  %v48 = vunpack.c.l.b16 %v35
  %v49 = vunpack.c.l.b16 %v36
  %v50 = vunpack.c.l.b16 %v37
  %v51 = vunpack.c.l.b16 %v38
  %v52 = vunpack.c.l.b16 %v39
  %v53 = vpack.c.b16 %v49, %v48
  %v54 = vpack.c.b16 %v51, %v50
  %v55 = vpack.c.b16 %v52, %v52
  %v59 = vunpack.c.l.b16 %v40
  %v60 = vunpack.c.l.b16 %v41
  %v61 = vunpack.c.l.b16 %v42
  %v62 = vpack.c.b16 %v60, %v59
  %v63 = vpack.c.b16 %v61, %v61
  %vm65 = vcmask 195584
  %v67 = vsel %vm65, %v53, 0
  %v70 = vsel %vm65, %v54, 0
  %v73 = vsel %vm65, %v55, 0
  %vm75 = vcmask 1043456
  %v77 = vsel %vm75, %v63, 0
  %79 = vmatprep.subr.bf16.mxu0 0
  %80 = vmatpush1.bf16.msra.mxu0 0
  %81 = vmatprep.subr.bf16.mxu0 0
  %82 = vmatpush1.bf16.msra.mxu0 0
  %83 = vmatprep.subr.bf16.mxu0 0
  %84 = vmatpush1.bf16.msra.mxu0 0
  %85 = vmatprep.subr.bf16.mxu0 0
  %86 = vmatpush1.bf16.msra.mxu0 0
  %87 = vmatprep.subr.bf16.mxu0 0
  %88 = vmatpush1.bf16.msra.mxu0 0
  %89 = vmatprep.subr.bf16.mxu0 0
  %90 = vmatpush1.bf16.msra.mxu0 0
  %91 = vmatprep.subr.bf16.mxu0 0
  %92 = vmatpush1.bf16.msra.mxu0 %v77
  %93 = vmatprep.subr.bf16.mxu0 0
  %94 = vmatpush1.bf16.msra.mxu0 %v62
  %95 = vmatprep.subr.bf16.mxu0 0
  %96 = vmatpush2.bf16.msra.mxu0 0
  %97 = vmatprep.subr.bf16.mxu0 0
  %98 = vmatpush2.bf16.msra.mxu0 0
  %99 = vmatprep.subr.bf16.mxu0 0
  %100 = vmatpush2.bf16.msra.mxu0 0
  %101 = vmatprep.subr.bf16.mxu0 0
  %102 = vmatpush2.bf16.msra.mxu0 0
  %103 = vmatprep.subr.bf16.mxu0 0
  %104 = vmatpush2.bf16.msra.mxu0 0
  %105 = vmatprep.subr.bf16.mxu0 0
  %106 = vmatpush2.bf16.msra.mxu0 0
  %107 = vmatprep.subr.bf16.mxu0 0
  %108 = vmatpush2.bf16.msra.mxu0 0
  %109 = vmatprep.subr.bf16.mxu0 0
  %110 = vmatpush2.bf16.msra.mxu0 0
  %111 = vmatprep.mubr.bf16.mxu0 0
  %112 = vmatmul.mubr.bf16.gmra.mxu0 %v67
  %v113 = vpop.f32.mrf.mxu0
  %v114 = vadd.f32 0.0, %v113
  %v115 = vpop.f32.mrf.mxu0
  %v116 = vpop.f32.mrf.mxu0
  %v117 = vadd.f32 0.0, %v116
  %v118 = vpop.f32.mrf.mxu0
  %119 = vmatprep.mubr.bf16.mxu0 0
  %120 = vmatmul.mubr.bf16.gmra.mxu0 %v70
  %v121 = vpop.f32.mrf.mxu0
  %v122 = vadd.f32 0.0, %v121
  %v123 = vpop.f32.mrf.mxu0
  %v124 = vpop.f32.mrf.mxu0
  %v125 = vadd.f32 0.0, %v124
  %v126 = vpop.f32.mrf.mxu0
  %127 = vmatprep.mubr.bf16.mxu0 0
  %128 = vmatmul.mubr.bf16.gmra.mxu0 %v73
  %v129 = vpop.f32.mrf.mxu0
  %v130 = vadd.f32 0.0, %v129
  %v131 = vpop.f32.mrf.mxu0
  %v132 = vpop.f32.mrf.mxu0
  %v133 = vpop.f32.mrf.mxu0
  %134 = vdwg.mxu0
  %136 = vset.pattern.permute.xlu0 0
  %137 = vperm.xlu0 %136, %v30
  %v138 = vpop.permute.xlu0 %137
  %141 = vset.pattern.permute.xlu0 0
  %142 = vperm.xlu0 %141, %v31
  %v143 = vpop.permute.xlu0 %142
  %146 = vset.pattern.permute.xlu0 0
  %147 = vperm.xlu0 %146, %v32
  %v148 = vpop.permute.xlu0 %147
  %151 = vset.pattern.permute.xlu0 0
  %152 = vperm.xlu0 %151, %v33
  %v153 = vpop.permute.xlu0 %152
  %156 = vset.pattern.permute.xlu0 0
  %157 = vperm.xlu0 %156, %v34
  %v158 = vpop.permute.xlu0 %157
  %v160 = vmul.f32 %v114, %v138
  %v161 = vmul.f32 %v117, %v143
  %v162 = vmul.f32 %v122, %v148
  %v163 = vmul.f32 %v125, %v153
  %v164 = vmul.f32 %v130, %v158
  %v165 = vadd.f32 %v160, %v161
  %v166 = vadd.f32 %v165, %v162
  %v167 = vadd.f32 %v166, %v163
  %vm168 = vcmask 1041408
  %v169 = vsel %vm168, %v164, 0.0
  %v170 = vadd.f32 %v167, %v169
  %v171 = vrot.slane %v170, 4
  %v172 = vadd.f32 %v170, %v171
  %v173 = vrot.slane %v172, 2
  %v174 = vadd.f32 %v172, %v173
  %v175 = vrot.slane %v174, 1
  %v176 = vadd.f32 %v174, %v175
  %v177 = vmul.f32 %v176, 0.03125
  %v178 = vsub.f32 %v114, %v177
  %v179 = vsub.f32 %v117, %v177
  %v180 = vsub.f32 %v122, %v177
  %v181 = vsub.f32 %v125, %v177
  %v182 = vsub.f32 %v130, %v177
  %v183 = vmul.f32 %v178, %v138
  %v184 = vmul.f32 %v179, %v143
  %v185 = vmul.f32 %v180, %v148
  %v186 = vmul.f32 %v181, %v153
  %v187 = vmul.f32 %v182, %v158
  %v188 = vmul.f32 %v183, %v183
  %v189 = vmul.f32 %v184, %v184
  %v190 = vmul.f32 %v185, %v185
  %v191 = vmul.f32 %v186, %v186
  %v192 = vmul.f32 %v187, %v187
  %v193 = vadd.f32 %v188, %v189
  %v194 = vadd.f32 %v193, %v190
  %v195 = vadd.f32 %v194, %v191
  %v196 = vsel %vm168, %v192, 0.0
  %v197 = vadd.f32 %v195, %v196
  %v198 = vrot.slane %v197, 4
  %v199 = vadd.f32 %v197, %v198
  %v200 = vrot.slane %v199, 2
  %v201 = vadd.f32 %v199, %v200
  %v202 = vrot.slane %v201, 1
  %v203 = vadd.f32 %v201, %v202
  %v204 = vmul.f32 %v203, 0.03125
  %v205 = vadd.f32 %v204, 1e-05
  %v206 = vrsqrt.pop %v205
  %v207 = vmul.f32 %v178, %v206
  %v208 = vmul.f32 %v179, %v206
  %v209 = vmul.f32 %v180, %v206
  %v210 = vmul.f32 %v181, %v206
  %v211 = vmul.f32 %v182, %v206
  %v212 = vld [vmem:[%s3] sm:$0x1]
  %v214 = vlaneseq
  %v215 = vshrl.u32 %v214, 7
  %v216 = vsub.s32 0, %v215
  %v217 = vrot.slane %v212, %v216
  %v219 = vmul.f32 %v207, %v217
  %v220 = vmul.f32 %v208, %v217
  %v221 = vmul.f32 %v209, %v217
  %v222 = vmul.f32 %v210, %v217
  %v223 = vmul.f32 %v211, %v217
  %v224 = vld [vmem:[%s4] sm:$0x1]
  %v226 = vlaneseq
  %v227 = vshrl.u32 %v226, 7
  %v228 = vsub.s32 0, %v227
  %v229 = vrot.slane %v224, %v228
  %v231 = vadd.f32 %v219, %v229
  %v232 = vadd.f32 %v220, %v229
  %v233 = vadd.f32 %v221, %v229
  %v234 = vadd.f32 %v222, %v229
  %v235 = vadd.f32 %v223, %v229
  %v236 = vmax.f32 %v231, 0.0
  %v237 = vmax.f32 %v232, 0.0
  %v238 = vmax.f32 %v233, 0.0
  %v239 = vmax.f32 %v234, 0.0
  %v240 = vmax.f32 %v235, 0.0
  %v241 = vmul.f32 %v236, %v138
  %v242 = vmul.f32 %v237, %v143
  %v243 = vmul.f32 %v238, %v148
  %v244 = vmul.f32 %v239, %v153
  %v245 = vmul.f32 %v240, %v158
  %246 = vst [vmem:[#allocation2] sm:$0xf] 0
  %247 = vst [vmem:[#allocation2 + $0x4] sm:$0xf] 0
  %248 = vst [vmem:[#allocation2 + $0x8] sm:$0xf] 0
  %249 = vst [vmem:[#allocation2 + $0xc] sm:$0xf] 0
  %250 = vst [vmem:[#allocation2 + $0x10] sm:$0x3] 0
  %v251 = vpack.c.bf16 %v242, %v241
  %v252 = vpack.c.bf16 %v244, %v243
  %v253 = vpack.c.bf16 %v245, %v245
  %v257 = vunpack.c.l.b16 %v251
  %v258 = vunpack.c.h.b16 %v251
  %v259 = vunpack.c.l.b16 %v252
  %v260 = vunpack.c.h.b16 %v252
  %v261 = vunpack.c.l.b16 %v253
  %v262 = vpack.c.b16 %v257, %v257
  %v263 = vpack.c.b16 %v258, %v258
  %v264 = vpack.c.b16 %v259, %v259
  %v265 = vpack.c.b16 %v260, %v260
  %v266 = vpack.c.b16 %v261, %v261
  %vm267 = vsmask.f32 256
  %vm268 = vsmask.f32 4368
  %vm269 = vmor %vm267, %vm268
  %v271 = vshrl.u32 %v262, 16
  %v273 = vrot.slane %v271, 7
  %v274 = vshll.u32 %v262, 16
  %v276 = vor.u32 %v273, %v274
  %v277 = vrot.slane %v273, 4
  %v279 = vshrl.u32 %v263, 16
  %v281 = vrot.slane %v279, 7
  %v282 = vshll.u32 %v263, 16
  %v284 = vor.u32 %v281, %v282
  %v285 = vsel %vm269, %v277, %v284
  %v286 = vrot.slane %v281, 4
  %v288 = vshrl.u32 %v264, 16
  %v290 = vrot.slane %v288, 7
  %v291 = vshll.u32 %v264, 16
  %v293 = vor.u32 %v290, %v291
  %v294 = vsel %vm269, %v286, %v293
  %v295 = vrot.slane %v290, 4
  %v297 = vshrl.u32 %v265, 16
  %v299 = vrot.slane %v297, 7
  %v300 = vshll.u32 %v265, 16
  %v302 = vor.u32 %v299, %v300
  %v303 = vsel %vm269, %v295, %v302
  %v304 = vrot.slane %v299, 4
  %v306 = vshrl.u32 %v266, 16
  %v308 = vrot.slane %v306, 7
  %v309 = vshll.u32 %v266, 16
  %v311 = vor.u32 %v308, %v309
  %v312 = vsel %vm269, %v304, %v311
  %vm318 = vcmask 1043456
  %vm319 = vsmask.f32 7938
  %vm320 = vmand %vm318, %vm319
  %v321 = vld [vmem:[#allocation2] sm:$0xf]
  %v322 = vsel %vm320, %v276, %v321
  %323 = vst [vmem:[#allocation2] sm:$0xf] %v322
  %324 = vst [vmem:[#allocation2 + $0x4] sm:$0xf] %v285
  %325 = vst [vmem:[#allocation2 + $0x8] sm:$0xf] %v294
  %326 = vst [vmem:[#allocation2 + $0xc] sm:$0xf] %v303
  %vm327 = vcmask 1041408
  %vm328 = vsmask.f32 1280
  %vm329 = vmand %vm327, %vm328
  %v330 = vld [vmem:[#allocation2 + $0x10] sm:$0x3]
  %v331 = vsel %vm329, %v312, %v330
  %332 = vst [vmem:[#allocation2 + $0x10] sm:$0x3] %v331
  %v333 = vld [vmem:[#allocation2] sm:$0xf]
  %v334 = vld [vmem:[#allocation2 + $0x4] sm:$0xf]
  %v335 = vld [vmem:[#allocation2 + $0x8] sm:$0xf]
  %v336 = vld [vmem:[#allocation2 + $0xc] sm:$0xf]
  %v337 = vld [vmem:[#allocation2 + $0x10] sm:$0x3]
  %v338 = vld [vmem:[%s5] sm:$0xf]
  %v339 = vld [vmem:[%s5 + $0x4] sm:$0xf]
  %v340 = vld [vmem:[%s5 + $0x8] sm:$0xf]
  %v341 = vld [vmem:[%s5 + $0xc] sm:$0xf]
  %v342 = vld [vmem:[%s5 + $0x10] sm:$0xf]
  %v343 = vld [vmem:[%s5 + $0x14] sm:$0xf]
  %v344 = vld [vmem:[%s5 + $0x18] sm:$0xf]
  %v345 = vld [vmem:[%s5 + $0x1c] sm:$0xf]
  %v346 = vld [vmem:[%s5 + $0x20] sm:$0xf]
  %v347 = vld [vmem:[%s5 + $0x24] sm:$0xf]
  %v348 = vld [vmem:[%s5 + $0x28] sm:$0xf]
  %v349 = vld [vmem:[%s5 + $0x2c] sm:$0xf]
  %v350 = vld [vmem:[%s5 + $0x30] sm:$0xf]
  %v351 = vld [vmem:[%s5 + $0x34] sm:$0xf]
  %v352 = vld [vmem:[%s5 + $0x38] sm:$0xf]
  %v353 = vld [vmem:[%s5 + $0x3c] sm:$0xf]
  %v354 = vld [vmem:[%s5 + $0x40] sm:$0xf]
  %v355 = vld [vmem:[%s5 + $0x44] sm:$0xf]
  %v356 = vld [vmem:[%s5 + $0x48] sm:$0xf]
  %v357 = vld [vmem:[%s5 + $0x4c] sm:$0xf]
  %v358 = vld [vmem:[%s5 + $0x50] sm:$0xf]
  %v359 = vld [vmem:[%s5 + $0x54] sm:$0xf]
  %v360 = vld [vmem:[%s5 + $0x58] sm:$0xf]
  %v361 = vld [vmem:[%s5 + $0x5c] sm:$0xf]
  %v362 = vld [vmem:[%s5 + $0x60] sm:$0xf]
  %v363 = vld [vmem:[%s5 + $0x64] sm:$0xf]
  %v364 = vld [vmem:[%s5 + $0x68] sm:$0xf]
  %v365 = vld [vmem:[%s5 + $0x6c] sm:$0xf]
  %v366 = vld [vmem:[%s5 + $0x70] sm:$0xf]
  %v367 = vld [vmem:[%s5 + $0x74] sm:$0xf]
  %v368 = vld [vmem:[%s5 + $0x78] sm:$0xf]
  %v369 = vld [vmem:[%s5 + $0x7c] sm:$0xf]
  %v370 = vld [vmem:[%s5 + $0x80] sm:$0xf]
  %v371 = vld [vmem:[%s5 + $0x84] sm:$0xf]
  %v372 = vld [vmem:[%s5 + $0x88] sm:$0xf]
  %v373 = vld [vmem:[%s5 + $0x8c] sm:$0xf]
  %v374 = vld [vmem:[%s5 + $0x90] sm:$0xf]
  %v375 = vld [vmem:[%s5 + $0x94] sm:$0xf]
  %v376 = vld [vmem:[%s5 + $0x98] sm:$0xf]
  %v377 = vld [vmem:[%s5 + $0x9c] sm:$0xf]
  %v378 = vld [vmem:[%s5 + $0xa0] sm:$0xf]
  %v379 = vld [vmem:[%s5 + $0xa4] sm:$0xf]
  %v380 = vld [vmem:[%s5 + $0xa8] sm:$0xf]
  %v381 = vld [vmem:[%s5 + $0xac] sm:$0xf]
  %v382 = vld [vmem:[%s5 + $0xb0] sm:$0xf]
  %v383 = vld [vmem:[%s5 + $0xb4] sm:$0xf]
  %v384 = vld [vmem:[%s5 + $0xb8] sm:$0xf]
  %v385 = vld [vmem:[%s5 + $0xbc] sm:$0xf]
  %v391 = vunpack.c.l.b16 %v333
  %v392 = vunpack.c.l.b16 %v334
  %v393 = vunpack.c.l.b16 %v335
  %v394 = vunpack.c.l.b16 %v336
  %v395 = vunpack.c.l.b16 %v337
  %v396 = vpack.c.b16 %v392, %v391
  %v397 = vpack.c.b16 %v394, %v393
  %v398 = vpack.c.b16 %v395, %v395
  %vm399 = vsmask.f32 7424
  %v401 = vshrl.u32 %v396, 16
  %v403 = vshll.u32 %v396, 16
  %v405 = vrot.slane %v403, 1
  %v406 = vor.u32 %v401, %v405
  %v408 = vshll.u32 %v397, 16
  %v410 = vrot.slane %v408, 1
  %v411 = vsel %vm399, %v406, %v410
  %v412 = vshrl.u32 %v397, 16
  %v414 = vor.u32 %v412, %v410
  %v416 = vshll.u32 %v398, 16
  %v418 = vrot.slane %v416, 1
  %v419 = vsel %vm399, %v414, %v418
  %v420 = vshrl.u32 %v398, 16
  %v422 = vor.u32 %v420, %v418
  %v442 = vunpack.c.l.b16 %v354
  %v443 = vunpack.c.l.b16 %v355
  %v444 = vunpack.c.l.b16 %v356
  %v445 = vunpack.c.l.b16 %v357
  %v446 = vunpack.c.l.b16 %v358
  %v447 = vunpack.c.l.b16 %v359
  %v448 = vunpack.c.l.b16 %v360
  %v449 = vunpack.c.l.b16 %v361
  %v450 = vunpack.c.l.b16 %v362
  %v451 = vunpack.c.l.b16 %v363
  %v452 = vunpack.c.l.b16 %v364
  %v453 = vunpack.c.l.b16 %v365
  %v454 = vunpack.c.l.b16 %v366
  %v455 = vunpack.c.l.b16 %v367
  %v456 = vunpack.c.l.b16 %v368
  %v457 = vunpack.c.l.b16 %v369
  %v458 = vpack.c.b16 %v443, %v442
  %v459 = vpack.c.b16 %v445, %v444
  %v460 = vpack.c.b16 %v447, %v446
  %v461 = vpack.c.b16 %v449, %v448
  %v462 = vpack.c.b16 %v451, %v450
  %v463 = vpack.c.b16 %v453, %v452
  %v464 = vpack.c.b16 %v455, %v454
  %v465 = vpack.c.b16 %v457, %v456
  %474 = vmatprep.subr.bf16.mxu0 0
  %475 = vmatpush1.bf16.msra.mxu0 %v465
  %476 = vmatprep.subr.bf16.mxu0 0
  %477 = vmatpush1.bf16.msra.mxu0 %v464
  %478 = vmatprep.subr.bf16.mxu0 0
  %479 = vmatpush1.bf16.msra.mxu0 %v463
  %480 = vmatprep.subr.bf16.mxu0 0
  %481 = vmatpush1.bf16.msra.mxu0 %v462
  %482 = vmatprep.subr.bf16.mxu0 0
  %483 = vmatpush1.bf16.msra.mxu0 %v461
  %484 = vmatprep.subr.bf16.mxu0 0
  %485 = vmatpush1.bf16.msra.mxu0 %v460
  %486 = vmatprep.subr.bf16.mxu0 0
  %487 = vmatpush1.bf16.msra.mxu0 %v459
  %488 = vmatprep.subr.bf16.mxu0 0
  %489 = vmatpush1.bf16.msra.mxu0 %v458
  %490 = vmatprep.subr.bf16.mxu0 0
  %491 = vmatpush2.bf16.msra.mxu0 0
  %492 = vmatprep.subr.bf16.mxu0 0
  %493 = vmatpush2.bf16.msra.mxu0 0
  %494 = vmatprep.subr.bf16.mxu0 0
  %495 = vmatpush2.bf16.msra.mxu0 0
  %496 = vmatprep.subr.bf16.mxu0 0
  %497 = vmatpush2.bf16.msra.mxu0 0
  %498 = vmatprep.subr.bf16.mxu0 0
  %499 = vmatpush2.bf16.msra.mxu0 0
  %500 = vmatprep.subr.bf16.mxu0 0
  %501 = vmatpush2.bf16.msra.mxu0 0
  %502 = vmatprep.subr.bf16.mxu0 0
  %503 = vmatpush2.bf16.msra.mxu0 0
  %504 = vmatprep.subr.bf16.mxu0 0
  %505 = vmatpush2.bf16.msra.mxu0 0
  %506 = vmatprep.mubr.bf16.mxu0 0
  %507 = vmatmul.mubr.bf16.gmra.mxu0 %v411
  %v508 = vpop.f32.mrf.mxu0
  %v509 = vadd.f32 0.0, %v508
  %v510 = vpop.f32.mrf.mxu0
  %v511 = vpop.f32.mrf.mxu0
  %v512 = vadd.f32 0.0, %v511
  %v513 = vpop.f32.mrf.mxu0
  %514 = vmatprep.mubr.bf16.mxu0 0
  %515 = vmatmul.mubr.bf16.gmra.mxu0 %v419
  %v516 = vpop.f32.mrf.mxu0
  %v517 = vadd.f32 0.0, %v516
  %v518 = vpop.f32.mrf.mxu0
  %v519 = vpop.f32.mrf.mxu0
  %v520 = vadd.f32 0.0, %v519
  %v521 = vpop.f32.mrf.mxu0
  %522 = vmatprep.mubr.bf16.mxu0 0
  %523 = vmatmul.mubr.bf16.gmra.mxu0 %v422
  %v524 = vpop.f32.mrf.mxu0
  %v525 = vadd.f32 0.0, %v524
  %v526 = vpop.f32.mrf.mxu0
  %v527 = vpop.f32.mrf.mxu0
  %v528 = vpop.f32.mrf.mxu0
  %529 = vdwg.mxu0
  %v549 = vunpack.c.l.b16 %v338
  %v550 = vunpack.c.l.b16 %v339
  %v551 = vunpack.c.l.b16 %v340
  %v552 = vunpack.c.l.b16 %v341
  %v553 = vunpack.c.l.b16 %v342
  %v554 = vunpack.c.l.b16 %v343
  %v555 = vunpack.c.l.b16 %v344
  %v556 = vunpack.c.l.b16 %v345
  %v557 = vunpack.c.l.b16 %v346
  %v558 = vunpack.c.l.b16 %v347
  %v559 = vunpack.c.l.b16 %v348
  %v560 = vunpack.c.l.b16 %v349
  %v561 = vunpack.c.l.b16 %v350
  %v562 = vunpack.c.l.b16 %v351
  %v563 = vunpack.c.l.b16 %v352
  %v564 = vunpack.c.l.b16 %v353
  %v565 = vpack.c.b16 %v550, %v549
  %v566 = vpack.c.b16 %v552, %v551
  %v567 = vpack.c.b16 %v554, %v553
  %v568 = vpack.c.b16 %v556, %v555
  %v569 = vpack.c.b16 %v558, %v557
  %v570 = vpack.c.b16 %v560, %v559
  %v571 = vpack.c.b16 %v562, %v561
  %v572 = vpack.c.b16 %v564, %v563
  %581 = vmatprep.subr.bf16.mxu0 0
  %582 = vmatpush1.bf16.msra.mxu0 %v572
  %583 = vmatprep.subr.bf16.mxu0 0
  %584 = vmatpush1.bf16.msra.mxu0 %v571
  %585 = vmatprep.subr.bf16.mxu0 0
  %586 = vmatpush1.bf16.msra.mxu0 %v570
  %587 = vmatprep.subr.bf16.mxu0 0
  %588 = vmatpush1.bf16.msra.mxu0 %v569
  %589 = vmatprep.subr.bf16.mxu0 0
  %590 = vmatpush1.bf16.msra.mxu0 %v568
  %591 = vmatprep.subr.bf16.mxu0 0
  %592 = vmatpush1.bf16.msra.mxu0 %v567
  %593 = vmatprep.subr.bf16.mxu0 0
  %594 = vmatpush1.bf16.msra.mxu0 %v566
  %595 = vmatprep.subr.bf16.mxu0 0
  %596 = vmatpush1.bf16.msra.mxu0 %v565
  %597 = vmatprep.subr.bf16.mxu0 0
  %598 = vmatpush2.bf16.msra.mxu0 0
  %599 = vmatprep.subr.bf16.mxu0 0
  %600 = vmatpush2.bf16.msra.mxu0 0
  %601 = vmatprep.subr.bf16.mxu0 0
  %602 = vmatpush2.bf16.msra.mxu0 0
  %603 = vmatprep.subr.bf16.mxu0 0
  %604 = vmatpush2.bf16.msra.mxu0 0
  %605 = vmatprep.subr.bf16.mxu0 0
  %606 = vmatpush2.bf16.msra.mxu0 0
  %607 = vmatprep.subr.bf16.mxu0 0
  %608 = vmatpush2.bf16.msra.mxu0 0
  %609 = vmatprep.subr.bf16.mxu0 0
  %610 = vmatpush2.bf16.msra.mxu0 0
  %611 = vmatprep.subr.bf16.mxu0 0
  %612 = vmatpush2.bf16.msra.mxu0 0
  %613 = vmatprep.mubr.bf16.mxu0 0
  %614 = vmatmul.mubr.bf16.gmra.mxu0 %v396
  %v615 = vpop.f32.mrf.mxu0
  %v616 = vadd.f32 %v509, %v615
  %v617 = vpop.f32.mrf.mxu0
  %v618 = vpop.f32.mrf.mxu0
  %v619 = vadd.f32 %v512, %v618
  %v620 = vpop.f32.mrf.mxu0
  %621 = vmatprep.mubr.bf16.mxu0 0
  %622 = vmatmul.mubr.bf16.gmra.mxu0 %v397
  %v623 = vpop.f32.mrf.mxu0
  %v624 = vadd.f32 %v517, %v623
  %v625 = vpop.f32.mrf.mxu0
  %v626 = vpop.f32.mrf.mxu0
  %v627 = vadd.f32 %v520, %v626
  %v628 = vpop.f32.mrf.mxu0
  %629 = vmatprep.mubr.bf16.mxu0 0
  %630 = vmatmul.mubr.bf16.gmra.mxu0 %v398
  %v631 = vpop.f32.mrf.mxu0
  %v632 = vadd.f32 %v525, %v631
  %v633 = vpop.f32.mrf.mxu0
  %v634 = vpop.f32.mrf.mxu0
  %v635 = vpop.f32.mrf.mxu0
  %636 = vdwg.mxu0
  %vm637 = vcmask 1046528
  %v638 = vrot.slane %v396, 1
  %v639 = vrot.slane %v397, 1
  %v640 = vsel %vm637, %v638, %v639
  %v641 = vrot.slane %v398, 1
  %v642 = vsel %vm637, %v639, %v641
  %v662 = vunpack.c.l.b16 %v370
  %v663 = vunpack.c.l.b16 %v371
  %v664 = vunpack.c.l.b16 %v372
  %v665 = vunpack.c.l.b16 %v373
  %v666 = vunpack.c.l.b16 %v374
  %v667 = vunpack.c.l.b16 %v375
  %v668 = vunpack.c.l.b16 %v376
  %v669 = vunpack.c.l.b16 %v377
  %v670 = vunpack.c.l.b16 %v378
  %v671 = vunpack.c.l.b16 %v379
  %v672 = vunpack.c.l.b16 %v380
  %v673 = vunpack.c.l.b16 %v381
  %v674 = vunpack.c.l.b16 %v382
  %v675 = vunpack.c.l.b16 %v383
  %v676 = vunpack.c.l.b16 %v384
  %v677 = vunpack.c.l.b16 %v385
  %v678 = vpack.c.b16 %v663, %v662
  %v679 = vpack.c.b16 %v665, %v664
  %v680 = vpack.c.b16 %v667, %v666
  %v681 = vpack.c.b16 %v669, %v668
  %v682 = vpack.c.b16 %v671, %v670
  %v683 = vpack.c.b16 %v673, %v672
  %v684 = vpack.c.b16 %v675, %v674
  %v685 = vpack.c.b16 %v677, %v676
  %694 = vmatprep.subr.bf16.mxu0 0
  %695 = vmatpush1.bf16.msra.mxu0 %v685
  %696 = vmatprep.subr.bf16.mxu0 0
  %697 = vmatpush1.bf16.msra.mxu0 %v684
  %698 = vmatprep.subr.bf16.mxu0 0
  %699 = vmatpush1.bf16.msra.mxu0 %v683
  %700 = vmatprep.subr.bf16.mxu0 0
  %701 = vmatpush1.bf16.msra.mxu0 %v682
  %702 = vmatprep.subr.bf16.mxu0 0
  %703 = vmatpush1.bf16.msra.mxu0 %v681
  %704 = vmatprep.subr.bf16.mxu0 0
  %705 = vmatpush1.bf16.msra.mxu0 %v680
  %706 = vmatprep.subr.bf16.mxu0 0
  %707 = vmatpush1.bf16.msra.mxu0 %v679
  %708 = vmatprep.subr.bf16.mxu0 0
  %709 = vmatpush1.bf16.msra.mxu0 %v678
  %710 = vmatprep.subr.bf16.mxu0 0
  %711 = vmatpush2.bf16.msra.mxu0 0
  %712 = vmatprep.subr.bf16.mxu0 0
  %713 = vmatpush2.bf16.msra.mxu0 0
  %714 = vmatprep.subr.bf16.mxu0 0
  %715 = vmatpush2.bf16.msra.mxu0 0
  %716 = vmatprep.subr.bf16.mxu0 0
  %717 = vmatpush2.bf16.msra.mxu0 0
  %718 = vmatprep.subr.bf16.mxu0 0
  %719 = vmatpush2.bf16.msra.mxu0 0
  %720 = vmatprep.subr.bf16.mxu0 0
  %721 = vmatpush2.bf16.msra.mxu0 0
  %722 = vmatprep.subr.bf16.mxu0 0
  %723 = vmatpush2.bf16.msra.mxu0 0
  %724 = vmatprep.subr.bf16.mxu0 0
  %725 = vmatpush2.bf16.msra.mxu0 0
  %726 = vmatprep.mubr.bf16.mxu0 0
  %727 = vmatmul.mubr.bf16.gmra.mxu0 %v640
  %v728 = vpop.f32.mrf.mxu0
  %v729 = vadd.f32 0.0, %v728
  %v730 = vpop.f32.mrf.mxu0
  %v731 = vpop.f32.mrf.mxu0
  %v732 = vadd.f32 0.0, %v731
  %v733 = vpop.f32.mrf.mxu0
  %734 = vmatprep.mubr.bf16.mxu0 0
  %735 = vmatmul.mubr.bf16.gmra.mxu0 %v642
  %v736 = vpop.f32.mrf.mxu0
  %v737 = vadd.f32 0.0, %v736
  %v738 = vpop.f32.mrf.mxu0
  %v739 = vpop.f32.mrf.mxu0
  %v740 = vadd.f32 0.0, %v739
  %v741 = vpop.f32.mrf.mxu0
  %742 = vmatprep.mubr.bf16.mxu0 0
  %743 = vmatmul.mubr.bf16.gmra.mxu0 %v641
  %v744 = vpop.f32.mrf.mxu0
  %v745 = vadd.f32 0.0, %v744
  %v746 = vpop.f32.mrf.mxu0
  %v747 = vpop.f32.mrf.mxu0
  %v748 = vpop.f32.mrf.mxu0
  %749 = vdwg.mxu0
  %v750 = vadd.f32 %v616, %v729
  %v751 = vadd.f32 %v619, %v732
  %v752 = vadd.f32 %v624, %v737
  %v753 = vadd.f32 %v627, %v740
  %v754 = vadd.f32 %v632, %v745
  %v755 = vmul.f32 %v750, %v138
  %v756 = vmul.f32 %v751, %v143
  %v757 = vmul.f32 %v752, %v148
  %v758 = vmul.f32 %v753, %v153
  %v759 = vmul.f32 %v754, %v158
  %v760 = vadd.f32 %v755, %v756
  %v761 = vadd.f32 %v760, %v757
  %v762 = vadd.f32 %v761, %v758
  %v763 = vsel %vm168, %v759, 0.0
  %v764 = vadd.f32 %v762, %v763
  %v765 = vrot.slane %v764, 4
  %v766 = vadd.f32 %v764, %v765
  %v767 = vrot.slane %v766, 2
  %v768 = vadd.f32 %v766, %v767
  %v769 = vrot.slane %v768, 1
  %v770 = vadd.f32 %v768, %v769
  %v771 = vmul.f32 %v770, 0.03125
  %v772 = vsub.f32 %v750, %v771
  %v773 = vsub.f32 %v751, %v771
  %v774 = vsub.f32 %v752, %v771
  %v775 = vsub.f32 %v753, %v771
  %v776 = vsub.f32 %v754, %v771
  %v777 = vmul.f32 %v772, %v138
  %v778 = vmul.f32 %v773, %v143
  %v779 = vmul.f32 %v774, %v148
  %v780 = vmul.f32 %v775, %v153
  %v781 = vmul.f32 %v776, %v158
  %v782 = vmul.f32 %v777, %v777
  %v783 = vmul.f32 %v778, %v778
  %v784 = vmul.f32 %v779, %v779
  %v785 = vmul.f32 %v780, %v780
  %v786 = vmul.f32 %v781, %v781
  %v787 = vadd.f32 %v782, %v783
  %v788 = vadd.f32 %v787, %v784
  %v789 = vadd.f32 %v788, %v785
  %v790 = vsel %vm168, %v786, 0.0
  %v791 = vadd.f32 %v789, %v790
  %v792 = vrot.slane %v791, 4
  %v793 = vadd.f32 %v791, %v792
  %v794 = vrot.slane %v793, 2
  %v795 = vadd.f32 %v793, %v794
  %v796 = vrot.slane %v795, 1
  %v797 = vadd.f32 %v795, %v796
  %v798 = vmul.f32 %v797, 0.03125
  %v799 = vadd.f32 %v798, 1e-05
  %v800 = vrsqrt.pop %v799
  %v801 = vmul.f32 %v772, %v800
  %v802 = vmul.f32 %v773, %v800
  %v803 = vmul.f32 %v774, %v800
  %v804 = vmul.f32 %v775, %v800
  %v805 = vmul.f32 %v776, %v800
  %v806 = vld [vmem:[%s6] sm:$0x1]
  %v808 = vlaneseq
  %v809 = vshrl.u32 %v808, 7
  %v810 = vsub.s32 0, %v809
  %v811 = vrot.slane %v806, %v810
  %v813 = vmul.f32 %v801, %v811
  %v814 = vmul.f32 %v802, %v811
  %v815 = vmul.f32 %v803, %v811
  %v816 = vmul.f32 %v804, %v811
  %v817 = vmul.f32 %v805, %v811
  %v818 = vld [vmem:[%s7] sm:$0x1]
  %v820 = vlaneseq
  %v821 = vshrl.u32 %v820, 7
  %v822 = vsub.s32 0, %v821
  %v823 = vrot.slane %v818, %v822
  %v825 = vadd.f32 %v813, %v823
  %v826 = vadd.f32 %v814, %v823
  %v827 = vadd.f32 %v815, %v823
  %v828 = vadd.f32 %v816, %v823
  %v829 = vadd.f32 %v817, %v823
  %v830 = vmax.f32 %v825, 0.0
  %v831 = vmax.f32 %v826, 0.0
  %v832 = vmax.f32 %v827, 0.0
  %v833 = vmax.f32 %v828, 0.0
  %v834 = vmax.f32 %v829, 0.0
  %v835 = vmul.f32 %v830, %v138
  %v836 = vmul.f32 %v831, %v143
  %v837 = vmul.f32 %v832, %v148
  %v838 = vmul.f32 %v833, %v153
  %v839 = vmul.f32 %v834, %v158
  %840 = vst [vmem:[%s8] sm:$0xff] %v835
  %841 = vst [vmem:[%s8 + $0x8] sm:$0xff] %v836
  %842 = vst [vmem:[%s8 + $0x10] sm:$0xff] %v837
  %843 = vst [vmem:[%s8 + $0x18] sm:$0xff] %v838
  %844 = vst [vmem:[%s8 + $0x20] sm:$0x3] %v839
  // Predicated region
  $region34: #{up1d_forward.1} parent=0 // pred_check
    _
  $region35: #{up1d_forward.1} parent=0 // pred_check_branch
    %846 = sbr.rel (0) target = $region37
  $region36: #{up1d_forward.1} parent=0 // pred_region
    _
  $region37: #{up1d_forward.1} parent=0 // pred_fallthru
    _
  // Predicated region
  $region38: #{up1d_forward.1} parent=0 // pred_check
    _
  $region39: #{up1d_forward.1} parent=0 // pred_check_branch
    %848 = sbr.rel (0) target = $region41
  $region40: #{up1d_forward.1} parent=0 // pred_region
    _
  $region41: #{up1d_forward.1} parent=0 // pred_fallthru
    _

</llo_original>
